<compile_context>
chip_gen: v7x
topology: tpu7x:2x2x1
jax: 0.10.0
libtpu: 0.0.40
codegen_flags: <defaults>
</compile_context>

<pallas_src>
import functools

import jax
import jax.numpy as jnp
from jax.experimental import pallas as pl
from jax.experimental.pallas import tpu as pltpu


# ---------------------------------------------------------------------------
# Kernels
# ---------------------------------------------------------------------------

def _fused_kernel(x_ref, w1_ref, w2_ref, o_ref, *, inv_hw):
    """One batch element per grid step: squeeze + excite + scale, all in VMEM."""
    # Squeeze: f32 lane-reduce; the (C, HW) tile stays in its native dtype.
    y_col = jnp.sum(x_ref[0], axis=-1, keepdims=True,
                    dtype=jnp.float32) * inv_hw                      # (C, 1)

    w1 = w1_ref[...]                                                 # (Cr, C) f32
    w2 = w2_ref[...]                                                 # (C, Cr) f32

    # Excite on the VPU (hidden dim C//r is tiny -> MXU would be near-idle).
    h = jnp.maximum(jnp.sum(w1 * y_col.T, axis=-1, keepdims=True), 0.0)   # (Cr, 1)
    gate = jax.nn.sigmoid(jnp.sum(w2 * h.T, axis=-1, keepdims=True))      # (C, 1)

    # Scale: re-read the tile from VMEM (don't keep one giant value live across
    # both the reduce and the multiply).
    o_ref[0] = x_ref[0] * gate.astype(o_ref.dtype)


def _reduce_kernel(x_ref, mean_ref, *, inv_hw):
    """Grid (B, C_tiles), fully parallel: per-channel means of one channel tile."""
    mean_ref[0] = jnp.sum(x_ref[0], axis=-1, keepdims=True,
                          dtype=jnp.float32) * inv_hw                # (c_tile, 1)


def _scale_excite_kernel(mean_ref, x_ref, w1_ref, w2_ref, o_ref):
    """Grid (B, C_tiles), fully parallel: recompute the (tiny) excitation for this
    batch and channel tile, then scale the x tile.  Avoids a third pallas_call."""
    y_col = mean_ref[0]                                              # (C, 1) f32
    w1 = w1_ref[...]                                                 # (Cr, C) f32
    w2 = w2_ref[...]                                                 # (c_tile, Cr) f32

    h = jnp.maximum(jnp.sum(w1 * y_col.T, axis=-1, keepdims=True), 0.0)   # (Cr, 1)
    gate = jax.nn.sigmoid(jnp.sum(w2 * h.T, axis=-1, keepdims=True))      # (c_tile, 1)

    o_ref[0] = x_ref[0] * gate.astype(o_ref.dtype)


# ---------------------------------------------------------------------------
# Wrapper helpers
# ---------------------------------------------------------------------------

def _vmem_capacity_bytes():
    """Per-TensorCore VMEM capacity; hardware query with device_kind fallback."""
    try:
        info = pltpu.get_tpu_info()
        cap = getattr(info, "vmem_capacity_bytes", None)
        if cap:
            return int(cap)
    except Exception:
        pass
    try:
        kind = jax.devices()[0].device_kind.lower()
    except Exception:
        kind = ""
    if "v7" in kind:
        return 64 << 20                       # v7x: 64 MiB per TensorCore
    if any(tag in kind for tag in ("v5", "v6")):
        return 128 << 20                      # v5e/v5p/v6e: 128 MiB
    return 64 << 20                           # unknown: conservative


def _largest_c_tile(c, max_rows):
    """Largest divisor of c that is a multiple of 8 and <= max_rows; falls back to
    the full extent (always a legal block shape) if no such divisor exists."""
    if c <= max_rows:
        return c
    t = (min(max_rows, c) // 8) * 8
    while t >= 8:
        if c % t == 0:
            return t
        t -= 8
    return c


# ---------------------------------------------------------------------------
# Wrapper
# ---------------------------------------------------------------------------

def se_layer(x, w1, w2, *, mode="auto"):
    """x: (B, C, H, W).  w1: (C//r, C), w2: (C, C//r) in PyTorch nn.Linear layout."""
    assert mode in ("auto", "fused", "split")
    b, c, h, w = x.shape
    hw = h * w
    cr = w1.shape[0]
    assert w1.shape == (cr, c) and w2.shape == (c, cr)

    itemsize = x.dtype.itemsize
    x_flat = x.reshape(b, c, hw)
    inv_hw = 1.0 / float(hw)

    # Cast the (tiny) weights to f32 once here instead of per grid step in-kernel.
    w1f = w1.astype(jnp.float32)
    w2f = w2.astype(jnp.float32)
    weight_bytes = 2 * (int(w1f.size) + int(w2f.size)) * 4   # double-buffered

    vmem_cap = _vmem_capacity_bytes()
    # Fused path footprint: (1, C, HW) in and out blocks, each double-buffered.
    fused_needed = 4 * c * hw * itemsize + weight_bytes + (1 << 20)

    if mode == "auto":
        # SE is purely HBM-bound: fused moves 2*|x|, split moves 3*|x|.  Take fused
        # whenever the per-batch block fits -- no batch-size gate.
        mode = "fused" if fused_needed <= int(0.8 * vmem_cap) else "split"

    if mode == "fused":
        vmem_limit = int(min(max(fused_needed + (4 << 20), 32 << 20), vmem_cap))
        assert fused_needed <= vmem_limit, (
            f"fused SE block needs ~{fused_needed} B VMEM > limit {vmem_limit}; "
            "use mode='split'")
        out = pl.pallas_call(
            functools.partial(_fused_kernel, inv_hw=inv_hw),
            out_shape=jax.ShapeDtypeStruct((b, c, hw), x.dtype),
            grid_spec=pltpu.PrefetchScalarGridSpec(
                num_scalar_prefetch=0,
                grid=(b,),
                in_specs=[
                    pl.BlockSpec((1, c, hw), lambda i: (i, 0, 0)),
                    pl.BlockSpec((cr, c), lambda i: (0, 0)),   # W1, native layout
                    pl.BlockSpec((c, cr), lambda i: (0, 0)),   # W2, native layout
                ],
                out_specs=pl.BlockSpec((1, c, hw), lambda i: (i, 0, 0)),
            ),
            compiler_params=pltpu.CompilerParams(
                dimension_semantics=("parallel",),
                vmem_limit_bytes=vmem_limit),
        )(x_flat, w1f, w2f)
        return out.reshape(b, c, h, w)

    # ---------------- split path: reduce -> (excite + scale) ----------------
    # Channel (sublane) tiling: HW stays full-extent and lane-dense; c_tile is a
    # multiple-of-8 divisor of C (exact for power-of-two C).
    tile_budget = max(2 << 20, int(0.4 * vmem_cap))
    # Scale kernel double-buffers its x in-block AND out-block.
    c_tile = _largest_c_tile(c, max(8, tile_budget // (4 * hw * itemsize)))
    # Reduce kernel has no large output block -> give it ~2x the rows.
    c_tile_r = _largest_c_tile(c, max(8, tile_budget // (2 * hw * itemsize)))

    scale_needed = 4 * c_tile * hw * itemsize + 2 * c * 4 + weight_bytes + (1 << 20)
    reduce_needed = 2 * c_tile_r * hw * itemsize + 2 * c_tile_r * 4 + (1 << 20)
    vmem_limit = int(min(max(scale_needed, reduce_needed, 32 << 20) + (4 << 20),
                         vmem_cap))
    assert max(scale_needed, reduce_needed) <= vmem_limit, (
        f"split SE tiles need ~{max(scale_needed, reduce_needed)} B VMEM > "
        f"limit {vmem_limit}")

    # (1) Squeeze: per-batch / per-channel-tile means, f32, fully parallel grid
    #     (feeds both v7x TensorCores even at B=1 as long as there are >=2 tiles).
    means = pl.pallas_call(
        functools.partial(_reduce_kernel, inv_hw=inv_hw),
        out_shape=jax.ShapeDtypeStruct((b, c, 1), jnp.float32),
        grid_spec=pltpu.PrefetchScalarGridSpec(
            num_scalar_prefetch=0,
            grid=(b, c // c_tile_r),
            in_specs=[pl.BlockSpec((1, c_tile_r, hw), lambda i, j: (i, j, 0))],
            out_specs=pl.BlockSpec((1, c_tile_r, 1), lambda i, j: (i, j, 0)),
        ),
        compiler_params=pltpu.CompilerParams(
            dimension_semantics=("parallel", "parallel"),
            vmem_limit_bytes=vmem_limit),
    )(x_flat)

    # (2) Excite + scale fused into one kernel: the excitation is a few thousand
    #     VPU flops per tile, so recomputing it per (batch, channel-tile) step is
    #     free and removes a third pallas_call plus the gates HBM round trip.
    out = pl.pallas_call(
        _scale_excite_kernel,
        out_shape=jax.ShapeDtypeStruct((b, c, hw), x.dtype),
        grid_spec=pltpu.PrefetchScalarGridSpec(
            num_scalar_prefetch=0,
            grid=(b, c // c_tile),
            in_specs=[
                pl.BlockSpec((1, c, 1), lambda i, j: (i, 0, 0)),        # means, batch i
                pl.BlockSpec((1, c_tile, hw), lambda i, j: (i, j, 0)),  # x tile
                pl.BlockSpec((cr, c), lambda i, j: (0, 0)),             # W1 (full)
                pl.BlockSpec((c_tile, cr), lambda i, j: (j, 0)),        # W2 rows of tile
            ],
            out_specs=pl.BlockSpec((1, c_tile, hw), lambda i, j: (i, j, 0)),
        ),
        compiler_params=pltpu.CompilerParams(
            dimension_semantics=("parallel", "parallel"),
            vmem_limit_bytes=vmem_limit),
    )(means, x_flat, w1f, w2f)
    return out.reshape(b, c, h, w)


# ---------------------------------------------------------------------------
# Reference + test
# ---------------------------------------------------------------------------

def _reference(x, w1, w2):
    y = jnp.mean(x, axis=(2, 3))                 # (B, C)
    y = jnp.maximum(y @ w1.T, 0.0)               # (B, C//r)
    y = jax.nn.sigmoid(y @ w2.T)                 # (B, C)
    return x * y[:, :, None, None]


if __name__ == "__main__":
    # channel=32, reduction=16 -> hidden=2; batch=2, spatial=16x16.
    B, C, H, W = 2, 32, 16, 16
    R = 16
    Cr = C // R

    key = jax.random.PRNGKey(0)
    kx, k1, k2 = jax.random.split(key, 3)
    x = jax.random.normal(kx, (B, C, H, W), dtype=jnp.float32)
    w1 = jax.random.normal(k1, (Cr, C), dtype=jnp.float32) * (1.0 / jnp.sqrt(C))
    w2 = jax.random.normal(k2, (C, Cr), dtype=jnp.float32) * (1.0 / jnp.sqrt(Cr))

    ref = _reference(x, w1, w2)

    out_auto = jax.block_until_ready(se_layer(x, w1, w2))            # auto -> fused here
    out_split = jax.block_until_ready(se_layer(x, w1, w2, mode="split"))

    assert out_auto.shape == (B, C, H, W)
    assert jnp.allclose(out_auto, ref, atol=2e-5, rtol=2e-5), "fused path mismatch"
    assert jnp.allclose(out_split, ref, atol=2e-5, rtol=2e-5), "split path mismatch"
    print("KERNEL_OK")
</pallas_src>

<mosaic_0001>
module attributes {stable_mosaic.version = 11 : i64} {
  func.func @_fused_kernel(%arg0: i32, %arg1: memref<1x32x256xf32, #tpu.memory_space<vmem>>, %arg2: memref<2x32xf32, #tpu.memory_space<vmem>>, %arg3: memref<32x2xf32, #tpu.memory_space<vmem>>, %arg4: memref<1x32x256xf32, #tpu.memory_space<vmem>>) attributes {dimension_semantics = [#tpu.dimension_semantics<parallel>], iteration_bounds = array<i64: 2>, scalar_prefetch = 0 : i64, scratch_operands = 0 : i64, tpu.core_type = #tpu.core_type<tc>, window_params = [{transform_indices = @transform_0, window_bounds = array<i64: 1, 32, 256>}, {pipeline_mode = #tpu.pipeline_mode<synchronous>, transform_indices = @transform_1, window_bounds = array<i64: 2, 32>}, {pipeline_mode = #tpu.pipeline_mode<synchronous>, transform_indices = @transform_2, window_bounds = array<i64: 32, 2>}, {transform_indices = @transform_3, window_bounds = array<i64: 1, 32, 256>}]} {
    %c0 = arith.constant 0 : index
    %c0_0 = arith.constant 0 : index
    %c0_1 = arith.constant 0 : index
    %0 = vector.load %arg1[%c0, %c0_0, %c0_1] : memref<1x32x256xf32, #tpu.memory_space<vmem>>, vector<1x32x256xf32>
    %1 = vector.shape_cast %0 : vector<1x32x256xf32> to vector<32x256xf32>
    %cst = arith.constant dense<0.000000e+00> : vector<32xf32>
    %2 = vector.multi_reduction <add>, %1, %cst [1] : vector<32x256xf32> to vector<32xf32>
    %3 = vector.shape_cast %2 : vector<32xf32> to vector<32x1xf32>
    %cst_2 = arith.constant 3.906250e-03 : f32
    %4 = vector.broadcast %cst_2 : f32 to vector<32x1xf32>
    %5 = arith.mulf %3, %4 : vector<32x1xf32>
    %c0_3 = arith.constant 0 : index
    %c0_4 = arith.constant 0 : index
    %6 = vector.load %arg2[%c0_3, %c0_4] : memref<2x32xf32, #tpu.memory_space<vmem>>, vector<2x32xf32>
    %c0_5 = arith.constant 0 : index
    %c0_6 = arith.constant 0 : index
    %7 = vector.load %arg3[%c0_5, %c0_6] : memref<32x2xf32, #tpu.memory_space<vmem>>, vector<32x2xf32>
    %8 = tpu.transpose %5, [1, 0] : vector<32x1xf32> -> vector<1x32xf32>
    %9 = vector.broadcast %8 : vector<1x32xf32> to vector<2x32xf32>
    %10 = arith.mulf %6, %9 : vector<2x32xf32>
    %cst_7 = arith.constant dense<0.000000e+00> : vector<2xf32>
    %11 = vector.multi_reduction <add>, %10, %cst_7 [1] : vector<2x32xf32> to vector<2xf32>
    %12 = vector.shape_cast %11 : vector<2xf32> to vector<2x1xf32>
    %cst_8 = arith.constant 0.000000e+00 : f32
    %13 = vector.broadcast %cst_8 : f32 to vector<2x1xf32>
    %14 = arith.maximumf %12, %13 : vector<2x1xf32>
    %15 = tpu.transpose %14, [1, 0] : vector<2x1xf32> -> vector<1x2xf32>
    %16 = vector.broadcast %15 : vector<1x2xf32> to vector<32x2xf32>
    %17 = arith.mulf %7, %16 : vector<32x2xf32>
    %cst_9 = arith.constant dense<0.000000e+00> : vector<32xf32>
    %18 = vector.multi_reduction <add>, %17, %cst_9 [1] : vector<32x2xf32> to vector<32xf32>
    %19 = vector.shape_cast %18 : vector<32xf32> to vector<32x1xf32>
    %20 = arith.negf %19 : vector<32x1xf32>
    %21 = math.exp %20 : vector<32x1xf32>
    %cst_10 = arith.constant 1.000000e+00 : f32
    %22 = vector.broadcast %cst_10 : f32 to vector<32x1xf32>
    %23 = arith.addf %22, %21 : vector<32x1xf32>
    %24 = arith.divf %22, %23 : vector<32x1xf32>
    %c0_11 = arith.constant 0 : index
    %c0_12 = arith.constant 0 : index
    %c0_13 = arith.constant 0 : index
    %25 = vector.load %arg1[%c0_11, %c0_12, %c0_13] : memref<1x32x256xf32, #tpu.memory_space<vmem>>, vector<1x32x256xf32>
    %26 = vector.shape_cast %25 : vector<1x32x256xf32> to vector<32x256xf32>
    %27 = vector.broadcast %24 : vector<32x1xf32> to vector<32x256xf32>
    %28 = arith.mulf %26, %27 : vector<32x256xf32>
    %c0_14 = arith.constant 0 : index
    %c0_15 = arith.constant 0 : index
    %c0_16 = arith.constant 0 : index
    %29 = vector.load %arg4[%c0_14, %c0_15, %c0_16] : memref<1x32x256xf32, #tpu.memory_space<vmem>>, vector<1x32x256xf32>
    %30 = vector.shape_cast %29 : vector<1x32x256xf32> to vector<32x256xf32>
    %31 = vector.shape_cast %28 : vector<32x256xf32> to vector<1x32x256xf32>
    tpu.vector_store %arg4[%c0_14, %c0_15, %c0_16], %31 {strides = array<i32>} : memref<1x32x256xf32, #tpu.memory_space<vmem>>, vector<1x32x256xf32>,
    return
  }
  func.func @transform_0(%arg0: i32) -> (i32, i32, i32) {
    %c0_i32 = arith.constant 0 : i32
    %c0_i32_0 = arith.constant 0 : i32
    %c0_i32_1 = arith.constant 0 : i32
    return %arg0, %c0_i32, %c0_i32_0 : i32, i32, i32
  }
  func.func @transform_1(%arg0: i32) -> (i32, i32) {
    %c0_i32 = arith.constant 0 : i32
    %c0_i32_0 = arith.constant 0 : i32
    %c0_i32_1 = arith.constant 0 : i32
    return %c0_i32, %c0_i32_0 : i32, i32
  }
  func.func @transform_2(%arg0: i32) -> (i32, i32) {
    %c0_i32 = arith.constant 0 : i32
    %c0_i32_0 = arith.constant 0 : i32
    %c0_i32_1 = arith.constant 0 : i32
    return %c0_i32, %c0_i32_0 : i32, i32
  }
  func.func @transform_3(%arg0: i32) -> (i32, i32, i32) {
    %c0_i32 = arith.constant 0 : i32
    %c0_i32_0 = arith.constant 0 : i32
    %c0_i32_1 = arith.constant 0 : i32
    return %arg0, %c0_i32, %c0_i32_0 : i32, i32, i32
  }
}

</mosaic_0001>

<llo_original>
// kernel: tpu_custom_call.1
$region0: #{tpu_custom_call.1}
  #allocation0 [shape = 'u32[]', space=smem, size = 0x4, offset = 0x4, fixed_abs, tag = 'smem constant byte address 0x4 - core index']
  #allocation1 [shape = 'u32[144,128]{1,0:T(1,128)}', space=vmem, size = 0x12000, scoped, tag = 'internal scratch']
  %s0 = inlined_call_operand.hbm [shape: f32[2,32,256], index: 0, kind: input, shape index: {}]
  %s1 = inlined_call_operand.vmem [shape: f32[2,32], index: 1, kind: input, shape index: {}]
  %s2 = inlined_call_operand.vmem [shape: f32[32,2], index: 2, kind: input, shape index: {}]
  %s3 = inlined_call_operand.hbm [shape: f32[2,32,256], index: 3, kind: output, shape index: {}]
  %s4 = sld [smem:[#allocation0]]
  $region49: #{tpu_custom_call.1} parent=0
    _
  %s6 = ssub.s32 1, %s4
  %s7 = scalar_select 0, %s6, %s4
  $region1: #{tpu_custom_call.1} parent=0
    #allocation2 [shape = 'u8[65536]{0}', space=vmem, size = 0x10000, scoped, tag = 'input window, operand 0']
    #allocation3 [shape = 's32[2]{0}', space=sflag, size = 0x8, scoped, tag = 'scoped memory for tpu_custom_call.1']
    #allocation4 [shape = 's32[2]{0}', space=sflag, size = 0x8, scoped, tag = 'scoped memory for tpu_custom_call.1']
    #allocation5 [shape = 'u8[65536]{0}', space=vmem, size = 0x10000, scoped, tag = 'output window, operand 0']
    %8 = vsyncpa [#allocation3], 0
    %s9 = scalar_lea.sflag [#allocation3], 1
    %10 = vsyncpa %s9, 0
    %11 = vsyncpa [#allocation4], 0
    %s12 = scalar_lea.sflag [#allocation4], 1
    %13 = vsyncpa %s12, 0
    loop: start=0, step=1, limit=4
    $region2: #{tpu_custom_call.1} parent=1 // loop_pre_header
      _
    $region3: #{tpu_custom_call.1} parent=1 // loop_header
      %s15 = sphi 0, %s19
      %p16 = scmp.ge.s32.totalorder %s15, 4
      %s25 = sphi 0, %s27
      %s28 = sphi 0, %s25
      %s29 = sphi 0, %s28
      %s45 = sphi 0, %s29
      %s49 = sphi 0, %s49
      %s51 = sphi 0, %s49
      %s52 = sphi 0, %s51
      %s66 = sphi 0, %s52
      %s70 = sphi 0, %s70
      %s72 = sphi 0, %s70
      %s73 = sphi 0, %s72
      %s87 = sphi 0, %s73
      %s93 = sphi 0, %s95
      %s96 = sphi 0, %s93
      %s97 = sphi 0, %s96
      %s113 = sphi 0, %s97
    $region4: #{tpu_custom_call.1} parent=1 // loop_header_branch
      %18 = sbr.rel (%p16) target = $region8
    $region5: #{tpu_custom_call.1} parent=1 // loop_body
      %s20 = ssub.s32 %s15, 1
      %s21 = ssub.s32 %s15, 2
      %s22 = sadd.s32 %s15, 1
      %s23 = ssub.s32 %s15, %s22
      %p24 = scmp.eq.s32.totalorder %s23, 0
      %s26 = sadd.s32 %s25, 1
      %s27 = scalar_select %p24, %s25, %s26
      %p30 = pneg %p24
      %p31 = scmp.eq.s32.totalorder %s15, 1
      %p32 = por %p30, %p31
      %p33 = scmp.ne.s32.totalorder %s25, %s28
      %p34 = scmp.eq.s32.totalorder %s15, 0
      %p35 = por %p33, %p34
      %p36 = scmp.ne.s32.totalorder %s25, %s28
      %p37 = scmp.eq.s32.totalorder %s20, 1
      %p38 = por %p36, %p37
      %p39 = scmp.ne.s32.totalorder %s28, %s29
      %p40 = scmp.eq.s32.totalorder %s20, 0
      %p41 = por %p39, %p40
      %p42 = scmp.ne.s32.totalorder %s28, %s29
      %p43 = scmp.eq.s32.totalorder %s21, 1
      %p44 = por %p42, %p43
      %p46 = scmp.ne.s32.totalorder %s29, %s45
      %p47 = scmp.eq.s32.totalorder %s21, 0
      %p48 = por %p46, %p47
      %s50 = sadd.s32 %s49, 1
      %p53 = scmp.eq.s32.totalorder %s15, 1
      %p54 = scmp.ne.s32.totalorder %s49, %s51
      %p55 = scmp.eq.s32.totalorder %s15, 0
      %p56 = por %p54, %p55
      %p57 = scmp.ne.s32.totalorder %s49, %s51
      %p58 = scmp.eq.s32.totalorder %s20, 1
      %p59 = por %p57, %p58
      %p60 = scmp.ne.s32.totalorder %s51, %s52
      %p61 = scmp.eq.s32.totalorder %s20, 0
      %p62 = por %p60, %p61
      %p63 = scmp.ne.s32.totalorder %s51, %s52
      %p64 = scmp.eq.s32.totalorder %s21, 1
      %p65 = por %p63, %p64
      %p67 = scmp.ne.s32.totalorder %s52, %s66
      %p68 = scmp.eq.s32.totalorder %s21, 0
      %p69 = por %p67, %p68
      %s71 = sadd.s32 %s70, 1
      %p74 = scmp.eq.s32.totalorder %s15, 1
      %p75 = scmp.ne.s32.totalorder %s70, %s72
      %p76 = scmp.eq.s32.totalorder %s15, 0
      %p77 = por %p75, %p76
      %p78 = scmp.ne.s32.totalorder %s70, %s72
      %p79 = scmp.eq.s32.totalorder %s20, 1
      %p80 = por %p78, %p79
      %p81 = scmp.ne.s32.totalorder %s72, %s73
      %p82 = scmp.eq.s32.totalorder %s20, 0
      %p83 = por %p81, %p82
      %p84 = scmp.ne.s32.totalorder %s72, %s73
      %p85 = scmp.eq.s32.totalorder %s21, 1
      %p86 = por %p84, %p85
      %p88 = scmp.ne.s32.totalorder %s73, %s87
      %p89 = scmp.eq.s32.totalorder %s21, 0
      %p90 = por %p88, %p89
      %s91 = ssub.s32 %s15, %s22
      %p92 = scmp.eq.s32.totalorder %s91, 0
      %s94 = sadd.s32 %s93, 1
      %s95 = scalar_select %p92, %s93, %s94
      %p98 = pneg %p92
      %p99 = scmp.eq.s32.totalorder %s15, 1
      %p100 = por %p98, %p99
      %p101 = scmp.ne.s32.totalorder %s93, %s96
      %p102 = scmp.eq.s32.totalorder %s15, 0
      %p103 = por %p101, %p102
      %p104 = scmp.ne.s32.totalorder %s93, %s96
      %p105 = scmp.eq.s32.totalorder %s20, 1
      %p106 = por %p104, %p105
      %p107 = scmp.ne.s32.totalorder %s96, %s97
      %p108 = scmp.eq.s32.totalorder %s20, 0
      %p109 = por %p107, %p108
      %p110 = scmp.ne.s32.totalorder %s96, %s97
      %p111 = scmp.eq.s32.totalorder %s21, 1
      %p112 = por %p110, %p111
      %p114 = scmp.ne.s32.totalorder %s97, %s113
      %p115 = scmp.eq.s32.totalorder %s21, 0
      %p116 = por %p114, %p115
      %p117 = scmp.le.s32.totalorder 1, %s15
      %p118 = scmp.lt.s32.totalorder %s15, 3
      %p119 = pnand %p117, %p118
      %p120 = pneg %p119
      // Predicated region
      $region9: #{tpu_custom_call.1} parent=5 // pred_check
        _
      $region10: #{tpu_custom_call.1} parent=5 // pred_check_branch
        %122 = sbr.rel (%p119) target = $region12
      $region11: #{tpu_custom_call.1} parent=5 // pred_region
        %s123 = ssub.s32 %s15, 1
        // Predicated region
        $region13: #{tpu_custom_call.1} parent=11 // pred_check
          %p124 = pneg %p62
        $region14: #{tpu_custom_call.1} parent=11 // pred_check_branch
          %126 = sbr.rel (%p124) target = $region16
        $region15: #{tpu_custom_call.1} parent=11 // pred_region
          _
        $region16: #{tpu_custom_call.1} parent=11 // pred_fallthru
          _
        // Predicated region
        $region17: #{tpu_custom_call.1} parent=11 // pred_check
          %p127 = pneg %p83
        $region18: #{tpu_custom_call.1} parent=11 // pred_check_branch
          %129 = sbr.rel (%p127) target = $region20
        $region19: #{tpu_custom_call.1} parent=11 // pred_region
          _
        $region20: #{tpu_custom_call.1} parent=11 // pred_fallthru
          _
      $region12: #{tpu_custom_call.1} parent=5 // pred_fallthru
        _
      %p130 = scmp.lt.s32.totalorder %s15, 2
      // Predicated region
      $region21: #{tpu_custom_call.1} parent=5 // pred_check
        %p131 = pneg %p130
      $region22: #{tpu_custom_call.1} parent=5 // pred_check_branch
        %133 = sbr.rel (%p131) target = $region24
      $region23: #{tpu_custom_call.1} parent=5 // pred_region
        // Predicated region
        $region25: #{tpu_custom_call.1} parent=23 // pred_check
          %p134 = pneg %p35
        $region26: #{tpu_custom_call.1} parent=23 // pred_check_branch
          %136 = sbr.rel (%p134) target = $region28
        $region27: #{tpu_custom_call.1} parent=23 // pred_region
          %s137 = sand.u32 %s25, 1
          %s138 = scalar_lea.sflag [#allocation3], %s137
          %s139 = sand.u32 %s25, 1
          %s140 = smul.addr %s139, 64
          %s141 = scalar_lea.vmem [#allocation2], %s140
          %s143 = ssub.s32 1024, 1024
          %144 = vsyncadd %s138, %s143
          %s145 = smul.addr %s15, 8
          %s146 = smul.addr %s145, 128
          %s147 = scalar_lea.hbm %s0, %s146
          %s148 = sshll.u32 %s141, 4
          %s149 = int_to_ptr.vmem [resolvable:$true] %s148
          %154 = dma.hbm_to_vmem [thread:$0]  %s147, 1024, %s149, %s138, 256, 256, 16
        $region28: #{tpu_custom_call.1} parent=23 // pred_fallthru
          _
      $region24: #{tpu_custom_call.1} parent=5 // pred_fallthru
        _
      %p155 = scmp.le.s32.totalorder 1, %s15
      %p156 = scmp.lt.s32.totalorder %s15, 3
      %p157 = pnand %p155, %p156
      %p158 = pneg %p157
      // Predicated region
      $region29: #{tpu_custom_call.1} parent=5 // pred_check
        _
      $region30: #{tpu_custom_call.1} parent=5 // pred_check_branch
        %160 = sbr.rel (%p157) target = $region32
      $region31: #{tpu_custom_call.1} parent=5 // pred_region
        %s161 = ssub.s32 %s15, 1
        %s162 = sand.u32 %s28, 1
        %s163 = scalar_lea.sflag [#allocation3], %s162
        %s164 = sand.u32 %s28, 1
        %s165 = smul.addr %s164, 64
        %s166 = scalar_lea.vmem [#allocation2], %s165
        // Predicated region
        $region33: #{tpu_custom_call.1} parent=31 // pred_check
          %p167 = pneg %p41
        $region34: #{tpu_custom_call.1} parent=31 // pred_check_branch
          %169 = sbr.rel (%p167) target = $region36
        $region35: #{tpu_custom_call.1} parent=31 // pred_region
          %170 = dma.done %s163, 1024
        $region36: #{tpu_custom_call.1} parent=31 // pred_fallthru
          _
        %s171 = sand.u32 %s28, 1
        %s172 = scalar_lea.sflag [#allocation3], %s171
        %s173 = sand.u32 %s28, 1
        %s174 = smul.addr %s173, 64
        %s175 = scalar_lea.vmem [#allocation2], %s174
        %p176 = pneg %p41
        %p177 = pneg %p38
        %p178 = pneg %p62
        %p179 = pneg %p59
        %p180 = pneg %p83
        %p181 = pneg %p80
        %p182 = pneg %p109
        %p183 = pneg %p106
        %s184 = sand.u32 %s96, 1
        %s185 = scalar_lea.sflag [#allocation4], %s184
        %s186 = sand.u32 %s96, 1
        %s187 = smul.addr %s186, 64
        %s188 = scalar_lea.vmem [#allocation5], %s187
        %v189 = vld [vmem:[%s166] sm:$0xff]
        %v190 = vld [vmem:[%s166 + $0x8] sm:$0xff]
        %v191 = vld [vmem:[%s166 + $0x10] sm:$0xff]
        %v192 = vld [vmem:[%s166 + $0x18] sm:$0xff]
        %v193 = vld [vmem:[%s166 + $0x20] sm:$0xff]
        %v194 = vld [vmem:[%s166 + $0x28] sm:$0xff]
        %v195 = vld [vmem:[%s166 + $0x30] sm:$0xff]
        %v196 = vld [vmem:[%s166 + $0x38] sm:$0xff]
        %v197 = vadd.f32 %v189, %v190
        %198 = vadd.xlane.f32.xlu0 %v197
        %v199 = vpop.xlane.xlu0 %198
        %v200 = vadd.f32 %v191, %v192
        %201 = vadd.xlane.f32.xlu0 %v200
        %v202 = vpop.xlane.xlu0 %201
        %v203 = vadd.f32 %v193, %v194
        %204 = vadd.xlane.f32.xlu0 %v203
        %v205 = vpop.xlane.xlu0 %204
        %v206 = vadd.f32 %v195, %v196
        %207 = vadd.xlane.f32.xlu0 %v206
        %v208 = vpop.xlane.xlu0 %207
        %v209 = vmul.f32 %v199, 0.00390625
        %v210 = vmul.f32 %v202, 0.00390625
        %v211 = vmul.f32 %v205, 0.00390625
        %v212 = vmul.f32 %v208, 0.00390625
        %v213 = vld [vmem:[%s1] sm:$0x3]
        %v214 = vld [vmem:[%s2] sm:$0xff]
        %v215 = vld [vmem:[%s2 + $0x8] sm:$0xff]
        %v216 = vld [vmem:[%s2 + $0x10] sm:$0xff]
        %v217 = vld [vmem:[%s2 + $0x18] sm:$0xff]
        %218 = vxpose.xlu0.b32.start [1/16] %v209, 128
        %219 = vxpose.xlu0.b32.cont [2/16] %v210, 128
        %220 = vxpose.xlu0.b32.cont [3/16] %v211, 128
        %221 = vxpose.xlu0.b32.cont [4/16] %v212, 128
        %222 = vxpose.xlu0.b32.cont [5/16] 0.0, 128
        %223 = vxpose.xlu0.b32.cont [6/16] 0.0, 128
        %224 = vxpose.xlu0.b32.cont [7/16] 0.0, 128
        %225 = vxpose.xlu0.b32.cont [8/16] 0.0, 128
        %226 = vxpose.xlu0.b32.cont [9/16] 0.0, 128
        %227 = vxpose.xlu0.b32.cont [10/16] 0.0, 128
        %228 = vxpose.xlu0.b32.cont [11/16] 0.0, 128
        %229 = vxpose.xlu0.b32.cont [12/16] 0.0, 128
        %230 = vxpose.xlu0.b32.cont [13/16] 0.0, 128
        %231 = vxpose.xlu0.b32.cont [14/16] 0.0, 128
        %232 = vxpose.xlu0.b32.cont [15/16] 0.0, 128
        %233 = vxpose.xlu0.b32.end [16/16] 0.0, 128
        %v234 = vpop.trf.xlu0
        %v235 = vpop.trf.xlu0
        %v236 = vpop.trf.xlu0
        %v237 = vpop.trf.xlu0
        %v238 = vpop.trf.xlu0
        %v239 = vpop.trf.xlu0
        %v240 = vpop.trf.xlu0
        %v241 = vpop.trf.xlu0
        %v242 = vpop.trf.xlu0
        %v243 = vpop.trf.xlu0
        %v244 = vpop.trf.xlu0
        %v245 = vpop.trf.xlu0
        %v246 = vpop.trf.xlu0
        %v247 = vpop.trf.xlu0
        %v248 = vpop.trf.xlu0
        %v249 = vpop.trf.xlu0
        %v250 = vlaneseq
        %v251 = vshrl.u32 %v250, 7
        %v252 = vsub.s32 0, %v251
        %v253 = vrot.slane %v234, %v252
        %v254 = vmul.f32 %v213, %v253
        %vm255 = vcmask 254976
        %v256 = vsel %vm255, %v254, 0.0
        %257 = vadd.xlane.f32.xlu0 %v256
        %v258 = vpop.xlane.xlu0 %257
        %v259 = vmax.f32 %v258, 0.0
        %260 = vxpose.xlu0.b32.start [1/16] %v259, 128
        %261 = vxpose.xlu0.b32.cont [2/16] 0.0, 128
        %262 = vxpose.xlu0.b32.cont [3/16] 0.0, 128
        %263 = vxpose.xlu0.b32.cont [4/16] 0.0, 128
        %264 = vxpose.xlu0.b32.cont [5/16] 0.0, 128
        %265 = vxpose.xlu0.b32.cont [6/16] 0.0, 128
        %266 = vxpose.xlu0.b32.cont [7/16] 0.0, 128
        %267 = vxpose.xlu0.b32.cont [8/16] 0.0, 128
        %268 = vxpose.xlu0.b32.cont [9/16] 0.0, 128
        %269 = vxpose.xlu0.b32.cont [10/16] 0.0, 128
        %270 = vxpose.xlu0.b32.cont [11/16] 0.0, 128
        %271 = vxpose.xlu0.b32.cont [12/16] 0.0, 128
        %272 = vxpose.xlu0.b32.cont [13/16] 0.0, 128
        %273 = vxpose.xlu0.b32.cont [14/16] 0.0, 128
        %274 = vxpose.xlu0.b32.cont [15/16] 0.0, 128
        %275 = vxpose.xlu0.b32.end [16/16] 0.0, 128
        %v276 = vpop.trf.xlu0
        %v277 = vpop.trf.xlu0
        %v278 = vpop.trf.xlu0
        %v279 = vpop.trf.xlu0
        %v280 = vpop.trf.xlu0
        %v281 = vpop.trf.xlu0
        %v282 = vpop.trf.xlu0
        %v283 = vpop.trf.xlu0
        %v284 = vpop.trf.xlu0
        %v285 = vpop.trf.xlu0
        %v286 = vpop.trf.xlu0
        %v287 = vpop.trf.xlu0
        %v288 = vpop.trf.xlu0
        %v289 = vpop.trf.xlu0
        %v290 = vpop.trf.xlu0
        %v291 = vpop.trf.xlu0
        %v292 = vlaneseq
        %v293 = vshrl.u32 %v292, 7
        %v294 = vsub.s32 0, %v293
        %v295 = vrot.slane %v276, %v294
        %v296 = vmul.f32 %v214, %v295
        %v297 = vmul.f32 %v215, %v295
        %v298 = vmul.f32 %v216, %v295
        %v299 = vmul.f32 %v217, %v295
        %vm300 = vcmask 15360
        %v301 = vsel %vm300, %v296, 0.0
        %302 = vadd.xlane.f32.xlu0 %v301
        %v303 = vpop.xlane.xlu0 %302
        %v304 = vsel %vm300, %v297, 0.0
        %305 = vadd.xlane.f32.xlu0 %v304
        %v306 = vpop.xlane.xlu0 %305
        %v307 = vsel %vm300, %v298, 0.0
        %308 = vadd.xlane.f32.xlu0 %v307
        %v309 = vpop.xlane.xlu0 %308
        %v310 = vsel %vm300, %v299, 0.0
        %311 = vadd.xlane.f32.xlu0 %v310
        %v312 = vpop.xlane.xlu0 %311
        %v313 = vxor.u32 %v303, 2147483648
        %v314 = vxor.u32 %v306, 2147483648
        %v315 = vxor.u32 %v309, 2147483648
        %v316 = vxor.u32 %v312, 2147483648
        %v317 = vmul.f32 %v313, 1.442695
        %v318 = vpow.pop %v317
        %v319 = vmul.f32 %v314, 1.442695
        %v320 = vpow.pop %v319
        %v321 = vmul.f32 %v315, 1.442695
        %v322 = vpow.pop %v321
        %v323 = vmul.f32 %v316, 1.442695
        %v324 = vpow.pop %v323
        %v325 = vadd.f32 %v318, 1.0
        %v326 = vadd.f32 %v320, 1.0
        %v327 = vadd.f32 %v322, 1.0
        %v328 = vadd.f32 %v324, 1.0
        %v329 = vrcp.pop %v325
        %v330 = vmul.f32 1.0, %v329
        %v331 = vrcp.pop %v326
        %v332 = vmul.f32 1.0, %v331
        %v333 = vrcp.pop %v327
        %v334 = vmul.f32 1.0, %v333
        %v335 = vrcp.pop %v328
        %v336 = vmul.f32 1.0, %v335
        %v337 = vmul.f32 %v189, %v330
        %v338 = vmul.f32 %v190, %v330
        %v339 = vmul.f32 %v191, %v332
        %v340 = vmul.f32 %v192, %v332
        %v341 = vmul.f32 %v193, %v334
        %v342 = vmul.f32 %v194, %v334
        %v343 = vmul.f32 %v195, %v336
        %v344 = vmul.f32 %v196, %v336
        %345 = vst [vmem:[%s188] sm:$0xff] %v337
        %346 = vst [vmem:[%s188 + $0x8] sm:$0xff] %v338
        %347 = vst [vmem:[%s188 + $0x10] sm:$0xff] %v339
        %348 = vst [vmem:[%s188 + $0x18] sm:$0xff] %v340
        %349 = vst [vmem:[%s188 + $0x20] sm:$0xff] %v341
        %350 = vst [vmem:[%s188 + $0x28] sm:$0xff] %v342
        %351 = vst [vmem:[%s188 + $0x30] sm:$0xff] %v343
        %352 = vst [vmem:[%s188 + $0x38] sm:$0xff] %v344
        %s353 = sand.u32 %s96, 1
        %s354 = scalar_lea.sflag [#allocation4], %s353
        %s355 = sand.u32 %s96, 1
        %s356 = smul.addr %s355, 64
        %s357 = scalar_lea.vmem [#allocation5], %s356
        // Predicated region
        $region37: #{tpu_custom_call.1} parent=31 // pred_check
          %p358 = pneg %p106
        $region38: #{tpu_custom_call.1} parent=31 // pred_check_branch
          %360 = sbr.rel (%p358) target = $region40
        $region39: #{tpu_custom_call.1} parent=31 // pred_region
          %s362 = ssub.s32 1024, 1024
          %363 = vsyncadd %s354, %s362
          %s364 = smul.addr %s20, 8
          %s365 = smul.addr %s364, 128
          %s366 = scalar_lea.hbm %s3, %s365
          %s367 = sshll.u32 %s357, 4
          %s368 = int_to_ptr.vmem [resolvable:$true] %s367
          %373 = dma.vmem_to_hbm [thread:$0]  %s368, 1024, %s366, %s354, 256, 256, 16
        $region40: #{tpu_custom_call.1} parent=31 // pred_fallthru
          _
      $region32: #{tpu_custom_call.1} parent=5 // pred_fallthru
        _
      %p374 = scmp.le.s32.totalorder 2, %s15
      // Predicated region
      $region41: #{tpu_custom_call.1} parent=5 // pred_check
        %p375 = pneg %p374
      $region42: #{tpu_custom_call.1} parent=5 // pred_check_branch
        %377 = sbr.rel (%p375) target = $region44
      $region43: #{tpu_custom_call.1} parent=5 // pred_region
        %s378 = ssub.s32 %s15, 2
        // Predicated region
        $region45: #{tpu_custom_call.1} parent=43 // pred_check
          %p379 = pneg %p112
        $region46: #{tpu_custom_call.1} parent=43 // pred_check_branch
          %381 = sbr.rel (%p379) target = $region48
        $region47: #{tpu_custom_call.1} parent=43 // pred_region
          %s382 = sand.u32 %s97, 1
          %s383 = scalar_lea.sflag [#allocation4], %s382
          %s384 = sand.u32 %s97, 1
          %s385 = smul.addr %s384, 64
          %s386 = scalar_lea.vmem [#allocation5], %s385
          %387 = dma.done %s383, 1024
        $region48: #{tpu_custom_call.1} parent=43 // pred_fallthru
          _
      $region44: #{tpu_custom_call.1} parent=5 // pred_fallthru
        _
    $region6: #{tpu_custom_call.1} parent=1 // loop_footer
      %s19 = sadd.s32 1, %s15
    $region7: #{tpu_custom_call.1} parent=1 // loop_footer_branch
      %14 = sbr.rel target = $region3
    $region8: #{tpu_custom_call.1} parent=1 // loop_exit
      _
    %388 = vsyncpa [#allocation3], 1
    %s389 = scalar_lea.sflag [#allocation3], 1
    %390 = vsyncpa %s389, 1
    %391 = vsyncpa [#allocation4], 1
    %s392 = scalar_lea.sflag [#allocation4], 1
    %393 = vsyncpa %s392, 1

</llo_original>
